<compile_context>
chip_gen: v5e
topology: v5e:2x2
jax: 0.10.0
libtpu: 0.0.40
codegen_flags: <defaults>
</compile_context>

<pallas_src>
import functools

import jax
import jax.numpy as jnp
from jax.experimental import pallas as pl
from jax.experimental.pallas import tpu as pltpu


def _round_up(x, m):
    return (x + m - 1) // m * m


def _pad_channels(c):
    # Lane-friendly channel count: at least one full 128-lane tile, otherwise
    # keep it 8-aligned (144 stays as a 128+16 MXU remainder pass).
    return 128 if c <= 128 else _round_up(c, 8)


# ----------------------------------------------------------------------------
# pltpu.roll convention guard (tiny one-time probe so the row-shift sign is
# guaranteed to match jnp.roll semantics on this backend).
# ----------------------------------------------------------------------------
_ROLL_SIGN = None


def _roll_sign():
    """Returns sign s.t. pltpu.roll(y, (sign*k) % n, axis=0) == jnp.roll(y, k, axis=0)."""
    global _ROLL_SIGN
    if _ROLL_SIGN is None:
        x = jnp.arange(16 * 128, dtype=jnp.float32).reshape(16, 128)

        def probe(x_ref, o_ref):
            o_ref[...] = pltpu.roll(x_ref[...], shift=3, axis=0)

        y = pl.pallas_call(
            probe, out_shape=jax.ShapeDtypeStruct((16, 128), jnp.float32))(x)
        if bool(jnp.array_equal(y, jnp.roll(x, 3, axis=0))):
            _ROLL_SIGN = 1
        elif bool(jnp.array_equal(y, jnp.roll(x, -3, axis=0))):
            _ROLL_SIGN = -1
        else:
            raise RuntimeError("unexpected pltpu.roll semantics")
    return _ROLL_SIGN


# ----------------------------------------------------------------------------
# Fused kernel: one batch element per grid step.
# ----------------------------------------------------------------------------
def _fused_head_kernel(x_ref, *refs, H, W, Rt, channels, roll_sign):
    """Fused conv1..conv4 (+folded BN) + cls/reg head.

    Activations live in flat (Rt, C) VMEM buffers: row r = (h+1)*W + w holds
    pixel (h, w); rows [0, W) and [(H+1)*W, Rt) are an always-zero halo.  A
    3x3 tap (dy, dx) is one (Rt, Cin)@(Cin, Cout) matmul of the whole flat
    buffer; its result is shifted by dy*W + dx rows (pltpu.roll, XLU) and
    contributions that would wrap horizontally are zeroed with row masks.
    """
    n_layers = len(channels) - 1
    w_refs = refs[0:2 * n_layers:2]
    b_refs = refs[1:2 * n_layers:2]
    o_ref = refs[2 * n_layers]
    buf0 = refs[2 * n_layers + 1]
    buf1 = refs[2 * n_layers + 2]

    HW = H * W
    mm_dtype = w_refs[0].dtype

    # Row masks, computed once and reused by every layer.
    r = jax.lax.broadcasted_iota(jnp.int32, (Rt, 1), 0)
    wc = r % W                                        # w coordinate of flat row r
    left_ok = (wc != 0).astype(jnp.float32)           # valid rows for dx = -1 taps
    right_ok = (wc != W - 1).astype(jnp.float32)      # valid rows for dx = +1 taps
    interior = ((r >= W) & (r < (H + 1) * W)).astype(jnp.float32)

    # Stage the input into the zero-haloed flat buffer (padding done here, not in HBM).
    c0 = channels[0]
    buf0[0:W, :] = jnp.zeros((W, buf0.shape[1]), jnp.float32)
    buf0[(H + 1) * W:Rt, :] = jnp.zeros((Rt - (H + 1) * W, buf0.shape[1]),
                                        jnp.float32)
    buf0[W:W + HW, 0:c0] = x_ref[0]

    src = buf0
    dst_cycle = (buf1, buf0)

    for li in range(n_layers):
        cin = channels[li]
        cout = channels[li + 1]
        dst = dst_cycle[li % 2]

        xv = src[:, 0:cin].astype(mm_dtype)           # loaded once; reused by all 9 taps
        w = w_refs[li]

        first = True
        for dy in (-1, 0, 1):
            for dx in (-1, 0, 1):
                tap = (dy + 1) * 3 + (dx + 1)
                y = jnp.dot(xv, w[tap], preferred_element_type=jnp.float32)
                s = dy * W + dx                       # out[r] needs y[r + s]
                if s != 0:
                    y = pltpu.roll(y, shift=(roll_sign * (-s)) % Rt, axis=0)
                if dx == -1:
                    y = y * left_ok
                elif dx == 1:
                    y = y * right_ok
                if first:
                    dst[:, 0:cout] = y
                    first = False
                else:
                    dst[:, 0:cout] = dst[:, 0:cout] + y

        if li < n_layers - 1:
            # Bias add; re-zero the halo rows so the next layer sees zero padding.
            dst[:, 0:cout] = (dst[:, 0:cout] + b_refs[li][...]) * interior
            src = dst
        else:
            # Head: bias, sigmoid on the classification channel only, store interior.
            res = dst[W:W + HW, 0:cout] + b_refs[li][...]
            cls = jax.nn.sigmoid(res[:, 0:1])
            ch = jax.lax.broadcasted_iota(jnp.int32, res.shape, 1)
            res = jnp.where(ch == 0, cls, res)
            o_ref[0] = res.astype(o_ref.dtype)


def _fused_call(N, H, W, kweights, kbiases):
    Rt = _round_up((H + 2) * W, 8)
    channels = (kweights[0].shape[1],) + tuple(wk.shape[2] for wk in kweights)
    out_c = channels[-1]
    buf0_c = max(channels[0::2])                      # input + outputs of layers 2, 4
    buf1_c = max(channels[1::2])                      # outputs of layers 1, 3, head

    kern = functools.partial(_fused_head_kernel, H=H, W=W, Rt=Rt,
                             channels=channels, roll_sign=_roll_sign())

    in_specs = [pl.BlockSpec((1, H * W, channels[0]), lambda n: (n, 0, 0))]
    for wk, bk in zip(kweights, kbiases):
        in_specs.append(pl.BlockSpec(wk.shape, lambda n: (0, 0, 0)))   # resident
        in_specs.append(pl.BlockSpec(bk.shape, lambda n: (0, 0)))

    return pl.pallas_call(
        kern,
        out_shape=jax.ShapeDtypeStruct((N, H * W, out_c), jnp.float32),
        grid=(N,),
        in_specs=in_specs,
        out_specs=pl.BlockSpec((1, H * W, out_c), lambda n: (n, 0, 0)),
        scratch_shapes=[pltpu.VMEM((Rt, buf0_c), jnp.float32),
                        pltpu.VMEM((Rt, buf1_c), jnp.float32)],
        compiler_params=pltpu.CompilerParams(
            dimension_semantics=("parallel",)),
    )


# ----------------------------------------------------------------------------
# Parameter handling
# ----------------------------------------------------------------------------
def prepare_kernel_params(params, matmul_dtype=jnp.float32):
    """Pad channels to lane-friendly widths, flatten 3x3 taps to a leading axis,
    optionally cast weights to the MXU input dtype (bf16 on v6e/v7x)."""
    kweights, kbiases = [], []
    for (w, b) in params:                             # w: (3,3,cin,cout) f32
        kh, kw, cin, cout = w.shape
        cin_p, cout_p = _pad_channels(cin), _pad_channels(cout)
        wp = jnp.zeros((kh * kw, cin_p, cout_p), jnp.float32)
        wp = wp.at[:, :cin, :cout].set(w.reshape(kh * kw, cin, cout))
        bp = jnp.zeros((1, cout_p), jnp.float32).at[0, :cout].set(b)
        kweights.append(wp.astype(matmul_dtype))
        kbiases.append(bp)                            # bias / epilogue stay f32
    return kweights, kbiases


def init_params(key, reg_layer=2):
    """Detection_Header params (input_angle_size=224 branch, use_bn=True).
    BatchNorm (eval mode, running stats) folded into the conv weights; the
    cls/reg heads fused into one conv with Cout = 1 + reg_layer."""
    eps = 1e-5
    dims = [(256, 144), (144, 96), (96, 96), (96, 96)]
    keys = jax.random.split(key, 5 * len(dims) + 4)
    ki = 0
    params = []
    for (cin, cout) in dims:
        w = 0.03 * jax.random.normal(keys[ki], (3, 3, cin, cout), jnp.float32); ki += 1
        gamma = 1.0 + 0.1 * jax.random.normal(keys[ki], (cout,), jnp.float32); ki += 1
        beta = 0.1 * jax.random.normal(keys[ki], (cout,), jnp.float32); ki += 1
        mean = 0.1 * jax.random.normal(keys[ki], (cout,), jnp.float32); ki += 1
        var = jnp.abs(jax.random.normal(keys[ki], (cout,), jnp.float32)) + 0.5; ki += 1
        scale = gamma / jnp.sqrt(var + eps)           # fold BN (eval mode) into conv
        params.append((w * scale, beta - mean * scale))
    w_cls = 0.03 * jax.random.normal(keys[ki], (3, 3, 96, 1), jnp.float32); ki += 1
    b_cls = 0.1 * jax.random.normal(keys[ki], (1,), jnp.float32); ki += 1
    w_reg = 0.03 * jax.random.normal(keys[ki], (3, 3, 96, reg_layer), jnp.float32); ki += 1
    b_reg = 0.1 * jax.random.normal(keys[ki], (reg_layer,), jnp.float32); ki += 1
    params.append((jnp.concatenate([w_cls, w_reg], axis=-1),
                   jnp.concatenate([b_cls, b_reg], axis=-1)))
    return params


def detection_header_forward(x_nchw, params, *, matmul_dtype=jnp.float32):
    """Matches Detection_Header.forward: NCHW in, NCHW out = cat([sigmoid(cls), reg], 1)."""
    N, C, H, W = x_nchw.shape
    n_out = params[-1][0].shape[-1]                   # 1 + reg_layer
    kweights, kbiases = prepare_kernel_params(params, matmul_dtype)
    x = jnp.transpose(x_nchw, (0, 2, 3, 1)).reshape(N, H * W, C)
    # TODO(synk): at production FFTRadNet resolutions, add row tiling with a
    # per-fused-conv halo (and keep bf16 activations) so blocks fit v7x's
    # 64 MiB VMEM and both TensorCores get row tiles.
    flat = [a for pair in zip(kweights, kbiases) for a in pair]
    out = _fused_call(N, H, W, kweights, kbiases)(x, *flat)      # (N, H*W, Cpad)
    out = out[:, :, :n_out].reshape(N, H, W, n_out)
    return jnp.transpose(out, (0, 3, 1, 2))


# ----------------------------------------------------------------------------
# Pure-JAX reference (lax.conv) for correctness check.
# ----------------------------------------------------------------------------
def _ref_conv(x, w, b):
    out = jax.lax.conv_general_dilated(
        x, w, window_strides=(1, 1), padding="SAME",
        dimension_numbers=("NHWC", "HWIO", "NHWC"))
    return out + b


def _ref_forward(x_nchw, params):
    x = jnp.transpose(x_nchw, (0, 2, 3, 1))
    for (w, b) in params[:4]:
        x = _ref_conv(x, w, b)
    w, b = params[4]
    y = _ref_conv(x, w, b)
    y = y.at[..., 0].set(jax.nn.sigmoid(y[..., 0]))
    return jnp.transpose(y, (0, 3, 1, 2))


if __name__ == "__main__":
    key = jax.random.PRNGKey(0)
    kp, kx = jax.random.split(key)
    params = init_params(kp, reg_layer=2)

    # Small input consistent with the module: NCHW, 256 input channels.
    x = jax.random.normal(kx, (2, 256, 16, 16), jnp.float32)

    out = jax.block_until_ready(detection_header_forward(x, params))
    assert out.shape == (2, 3, 16, 16), out.shape

    ref = jax.block_until_ready(_ref_forward(x, params))
    max_err = float(jnp.max(jnp.abs(out - ref)))
    assert jnp.allclose(out, ref, rtol=1e-3, atol=5e-3), max_err

    # bf16 MXU-input path (production setting for v6e / v7x); f32 accumulation
    # keeps it close to the f32 reference -- loose tolerance, structural check.
    out_bf16 = jax.block_until_ready(
        detection_header_forward(x, params, matmul_dtype=jnp.bfloat16))
    bf16_err = float(jnp.max(jnp.abs(out_bf16 - ref)))
    assert out_bf16.shape == (2, 3, 16, 16)
    assert jnp.allclose(out_bf16, ref, rtol=1e-1, atol=5e-1), bf16_err

    print("KERNEL_OK")
</pallas_src>

<mosaic_0001>
module attributes {stable_mosaic.version = 11 : i64} {
  func.func @probe(%arg0: memref<16x128xf32, #tpu.memory_space<vmem>>, %arg1: memref<16x128xf32, #tpu.memory_space<vmem>>) attributes {dimension_semantics = [], scalar_prefetch = 0 : i64, scratch_operands = 0 : i64, tpu.core_type = #tpu.core_type<tc>} {
    %c0 = arith.constant 0 : index
    %c0_0 = arith.constant 0 : index
    %0 = vector.load %arg0[%c0, %c0_0] : memref<16x128xf32, #tpu.memory_space<vmem>>, vector<16x128xf32>
    %c3_i32 = arith.constant 3 : i32
    %1 = tpu.dynamic_rotate %0 by %c3_i32 dim 0 : vector<16x128xf32>, i32 -> vector<16x128xf32>
    %c0_1 = arith.constant 0 : index
    %c0_2 = arith.constant 0 : index
    %2 = vector.load %arg1[%c0_1, %c0_2] : memref<16x128xf32, #tpu.memory_space<vmem>>, vector<16x128xf32>
    tpu.vector_store %arg1[%c0_1, %c0_2], %1 {strides = array<i32>} : memref<16x128xf32, #tpu.memory_space<vmem>>, vector<16x128xf32>,
    return
  }
}

</mosaic_0001>

<llo_original>
// kernel: tpu_custom_call.1
$region0: #{tpu_custom_call.1}
  #allocation0 [shape = 'u32[]', space=smem, size = 0x4, offset = 0x4, fixed_abs, tag = 'smem constant byte address 0x4 - core index']
  #allocation1 [shape = 'u32[72,128]{1,0:T(1,128)}', space=vmem, size = 0x9000, scoped, tag = 'internal scratch']
  %s0 = inlined_call_operand.hbm [shape: f32[16,128], index: 0, kind: input, shape index: {}]
  %s1 = inlined_call_operand.hbm [shape: f32[16,128], index: 1, kind: output, shape index: {}]
  %s2 = sld [smem:[#allocation0]]
  $region18: #{tpu_custom_call.1} parent=0
    _
  %s4 = ssub.s32 1, %s2
  %s5 = scalar_select 0, %s4, %s2
  $region1: #{tpu_custom_call.1} parent=0
    #allocation2 [shape = 'u8[8192]{0}', space=vmem, size = 0x2000, scoped, tag = 'input window, operand 0, single buffered']
    #allocation3 [shape = 's32[1]{0}', space=sflag, size = 0x4, scoped, tag = 'scoped memory for tpu_custom_call.1']
    #allocation4 [shape = 's32[1]{0}', space=sflag, size = 0x4, scoped, tag = 'scoped memory for tpu_custom_call.1']
    #allocation5 [shape = 'u8[8192]{0}', space=vmem, size = 0x2000, scoped, tag = 'output window, operand 0, single buffered']
    %6 = vsyncpa [#allocation3], 0
    %7 = vsyncpa [#allocation4], 0
    // Predicated region
    $region2: #{tpu_custom_call.1} parent=1 // pred_check
      _
    $region3: #{tpu_custom_call.1} parent=1 // pred_check_branch
      %9 = sbr.rel (0) target = $region5
    $region4: #{tpu_custom_call.1} parent=1 // pred_region
      %11 = vsyncadd [#allocation3], 0
      %s12 = sshll.u32 %s0, 4
      %s13 = int_to_ptr.hbm [resolvable:$true] %s12
      %s14 = sshll.u32 [#allocation2], 4
      %s15 = int_to_ptr.vmem [resolvable:$true] %s14
      %20 = dma.hbm_to_vmem [thread:$0]  %s13, 256, %s15, [#allocation3], 128, 128, 8
    $region5: #{tpu_custom_call.1} parent=1 // pred_fallthru
      _
    // Predicated region
    $region6: #{tpu_custom_call.1} parent=1 // pred_check
      _
    $region7: #{tpu_custom_call.1} parent=1 // pred_check_branch
      %22 = sbr.rel (0) target = $region9
    $region8: #{tpu_custom_call.1} parent=1 // pred_region
      %24 = dma.done [#allocation3], 256
    $region9: #{tpu_custom_call.1} parent=1 // pred_fallthru
      _
    %v25 = vld [vmem:[#allocation2] sm:$0xff]
    %v26 = vld [vmem:[#allocation2 + $0x8] sm:$0xff]
    %v27 = vrot.slane %v25, 5
    %v28 = vrot.slane %v26, 5
    %v29 = vlaneseq
    %v30 = vshrl.u32 %v29, 7
    %vm31 = vcmp.lt.s32.totalorder %v30, 3
    %v32 = vsel %vm31, %v27, %v28
    %v33 = vsel %vm31, %v28, %v27
    %34 = vst [vmem:[#allocation5] sm:$0xff] %v33
    %35 = vst [vmem:[#allocation5 + $0x8] sm:$0xff] %v32
    // Predicated region
    $region10: #{tpu_custom_call.1} parent=1 // pred_check
      _
    $region11: #{tpu_custom_call.1} parent=1 // pred_check_branch
      %37 = sbr.rel (0) target = $region13
    $region12: #{tpu_custom_call.1} parent=1 // pred_region
      %39 = vsyncadd [#allocation4], 0
      %s40 = sshll.u32 [#allocation5], 4
      %s41 = int_to_ptr.vmem [resolvable:$true] %s40
      %s42 = sshll.u32 %s1, 4
      %s43 = int_to_ptr.hbm [resolvable:$true] %s42
      %48 = dma.vmem_to_hbm [thread:$0]  %s41, 256, %s43, [#allocation4], 128, 128, 8
    $region13: #{tpu_custom_call.1} parent=1 // pred_fallthru
      _
    // Predicated region
    $region14: #{tpu_custom_call.1} parent=1 // pred_check
      _
    $region15: #{tpu_custom_call.1} parent=1 // pred_check_branch
      %50 = sbr.rel (0) target = $region17
    $region16: #{tpu_custom_call.1} parent=1 // pred_region
      %52 = dma.done [#allocation4], 256
    $region17: #{tpu_custom_call.1} parent=1 // pred_fallthru
      _
    %53 = vsyncpa [#allocation3], 1
    %54 = vsyncpa [#allocation4], 1

</llo_original>
